<compile_context>
chip_gen: v7x
topology: tpu7x:2x2x1
jax: 0.10.0
libtpu: 0.0.40
codegen_flags: <defaults>
</compile_context>

<pallas_src>
import jax
import jax.numpy as jnp
from jax.experimental import pallas as pl
from jax.experimental.pallas import tpu as pltpu


def _round_up(x, m):
    return ((x + m - 1) // m) * m


def _sublane_multiple(dtype):
    # Packed-tile sublane multiple: 8 for f32, 16 for bf16, 32 for int8/fp8.
    return max(8, 32 // jnp.dtype(dtype).itemsize)


def _spec(shape, index_map, single_buffer):
    if single_buffer:
        # Grid-invariant block: one VMEM buffer is enough (nothing to pipeline).
        return pl.BlockSpec(shape, index_map, pipeline_mode=pl.Buffered(1))
    return pl.BlockSpec(shape, index_map)


def _pooler_kernel(x_ref, w_ref, b_ref, o_ref):
    # x_ref: (tb, H_in)   first-token slab (activation dtype)
    # w_ref: (H_in, tn)   pre-transposed weight column block (activation dtype)
    # b_ref: (1, tn)      bias, already f32
    # o_ref: (tb, tn)
    y = jnp.dot(x_ref[...], w_ref[...], preferred_element_type=jnp.float32)
    o_ref[...] = jnp.tanh(y + b_ref[...]).astype(o_ref.dtype)


def bert_pooler(hidden_states, weight, bias, *, block_b=512, block_n=256):
    """BertPooler forward: tanh(hidden_states[:, 0, :] @ weight.T + bias).

    hidden_states: (B, S, H_in)
    weight:        (H_out, H_in)   (torch nn.Linear layout)
    bias:          (H_out,)
    returns:       (B, H_out)
    """
    B, S, H_in = hidden_states.shape
    H_out, H_in_w = weight.shape
    assert H_in_w == H_in, "weight in-features must match hidden size"

    act_dtype = hidden_states.dtype
    sub = _sublane_multiple(act_dtype)
    block_b = _round_up(block_b, sub)

    # --- operand prep (one-time, constant-foldable for inference) ---
    w_t = weight.T.astype(act_dtype)                  # (H_in, H_out)
    bias2d = bias.astype(jnp.float32).reshape(1, H_out)

    if H_in % 128 == 0:
        # Fold the token-0 slice into the kernel DMA: (B, S*H_in) is a free
        # view and a (tb, H_in) block at column-block 0 is exactly token 0.
        x_in = hidden_states.reshape(B, S * H_in)
    else:
        # TODO(synk): non-128-aligned hidden sizes fall back to an XLA slice
        # (one extra B*H_in HBM round trip) to keep the block lane-aligned.
        x_in = hidden_states[:, 0, :]

    # --- tiling ---
    # H_out axis: stream the weight in (H_in, tn) column blocks for large H_out
    # so the weight DMA overlaps the MXU and per-step VMEM stays bounded.
    if H_out >= 2 * block_n and H_out % block_n == 0:
        tn = block_n
    else:
        tn = H_out
    grid_n = pl.cdiv(H_out, tn)

    # Batch axis.
    if B <= block_b:
        tb = B
        if grid_n == 1 and B >= 2 * sub:
            # Guarantee >=2 parallel blocks so v7x megacore engages even when
            # the whole batch fits one tile (no-op on 1-TC v5e/v6e).
            tb = _round_up(pl.cdiv(B, 2), sub)
    else:
        tb = block_b
    grid_b = pl.cdiv(B, tb)

    itemsize = jnp.dtype(act_dtype).itemsize
    cost = pl.CostEstimate(
        flops=2 * B * H_in * H_out,
        transcendentals=B * H_out,
        bytes_accessed=(B * H_in * itemsize            # token-0 activations
                        + H_in * H_out * itemsize      # weight
                        + H_out * 4                    # bias (f32)
                        + B * H_out * itemsize),       # output
    )

    # VMEM budget with the actual buffer counts; only raise the scoped limit
    # when the working set needs it (keeps v5e's 16 MiB default safe).
    x_bufs = 1 if grid_b == 1 else 2
    w_bufs = 1 if grid_n == 1 else 2
    vmem_need = (x_bufs * tb * H_in * itemsize
                 + w_bufs * H_in * tn * itemsize
                 + 2 * tn * 4
                 + 2 * tb * tn * itemsize)
    cp_kwargs = dict(dimension_semantics=("parallel", "parallel"))
    if vmem_need > (12 << 20):
        cp_kwargs["vmem_limit_bytes"] = min(max(32 << 20, 2 * vmem_need), 64 << 20)
    compiler_params = pltpu.CompilerParams(**cp_kwargs)

    out_shape = jax.ShapeDtypeStruct((B, H_out), act_dtype)

    def _call(single_buffer):
        x_spec = _spec((tb, H_in), lambda i, j: (i, 0),
                       single_buffer and grid_b == 1)
        w_spec = _spec((H_in, tn), lambda i, j: (0, j),
                       single_buffer and grid_n == 1)
        b_spec = _spec((1, tn), lambda i, j: (0, j),
                       single_buffer and grid_n == 1)
        o_spec = pl.BlockSpec((tb, tn), lambda i, j: (i, j))
        return pl.pallas_call(
            _pooler_kernel,
            out_shape=out_shape,
            grid_spec=pltpu.PrefetchScalarGridSpec(
                num_scalar_prefetch=0,
                grid=(grid_b, grid_n),
                in_specs=[x_spec, w_spec, b_spec],
                out_specs=o_spec,
            ),
            compiler_params=compiler_params,
            cost_estimate=cost,
        )(x_in, w_t, bias2d)

    try:
        return _call(True)
    except Exception:
        # TODO(synk): this Pallas build rejected per-operand buffer counts
        # (pl.Buffered(1)); fall back to default double-buffering.
        return _call(False)


def bert_pooler_ref(hidden_states, weight, bias):
    first = hidden_states[:, 0, :]
    return jnp.tanh(first @ weight.T + bias)


if __name__ == "__main__":
    key = jax.random.PRNGKey(0)

    def _check(B, S, H):
        kx, kw, kb = jax.random.split(jax.random.fold_in(key, H), 3)
        hidden_states = jax.random.normal(kx, (B, S, H), dtype=jnp.float32)
        bound = 1.0 / (H ** 0.5)           # deterministic "nn.Linear" init
        weight = jax.random.uniform(kw, (H, H), minval=-bound, maxval=bound,
                                    dtype=jnp.float32)
        bias = jax.random.uniform(kb, (H,), minval=-bound, maxval=bound,
                                  dtype=jnp.float32)
        out = bert_pooler(hidden_states, weight, bias)
        jax.block_until_ready(out)
        ref = bert_pooler_ref(hidden_states, weight, bias)
        assert out.shape == (B, H)
        assert jnp.allclose(out, ref, atol=1e-4, rtol=1e-4), \
            float(jnp.max(jnp.abs(out - ref)))

    # Small lane-aligned shape: grid = (2, 1) -> resident single-buffered
    # weight/bias, two pipelined batch tiles (>=2 parallel blocks for v7x).
    _check(B=16, S=8, H=128)
    # Wider hidden size: grid = (1, 2) -> weight streamed in column blocks,
    # x resident (single-buffered) across the H_out axis.
    _check(B=4, S=4, H=512)

    print("KERNEL_OK")
</pallas_src>

<mosaic_0001>
module attributes {stable_mosaic.version = 11 : i64} {
  func.func @_pooler_kernel(%arg0: i32, %arg1: i32, %arg2: memref<8x128xf32, #tpu.memory_space<vmem>>, %arg3: memref<128x128xf32, #tpu.memory_space<vmem>>, %arg4: memref<1x128xf32, #tpu.memory_space<vmem>>, %arg5: memref<8x128xf32, #tpu.memory_space<vmem>>) attributes {dimension_semantics = [#tpu.dimension_semantics<parallel>, #tpu.dimension_semantics<parallel>], iteration_bounds = array<i64: 2, 1>, scalar_prefetch = 0 : i64, scratch_operands = 0 : i64, tpu.core_type = #tpu.core_type<tc>, window_params = [{transform_indices = @transform_0, window_bounds = array<i64: 8, 128>}, {pipeline_mode = #tpu.pipeline_mode<synchronous>, transform_indices = @transform_1, window_bounds = array<i64: 128, 128>}, {pipeline_mode = #tpu.pipeline_mode<synchronous>, transform_indices = @transform_2, window_bounds = array<i64: 1, 128>}, {transform_indices = @transform_3, window_bounds = array<i64: 8, 128>}]} {
    %c0 = arith.constant 0 : index
    %c0_0 = arith.constant 0 : index
    %0 = vector.load %arg2[%c0, %c0_0] : memref<8x128xf32, #tpu.memory_space<vmem>>, vector<8x128xf32>
    %c0_1 = arith.constant 0 : index
    %c0_2 = arith.constant 0 : index
    %1 = vector.load %arg3[%c0_1, %c0_2] : memref<128x128xf32, #tpu.memory_space<vmem>>, vector<128x128xf32>
    %cst = arith.constant dense<0.000000e+00> : vector<8x128xf32>
    %2 = tpu.matmul %0, %1, %cst {dimension_numbers = #tpu.dot_dimension_numbers<[1], [0], [0], [1], [0, 0, 1, 1], [], []>} : vector<8x128xf32>, vector<128x128xf32>, vector<8x128xf32> -> vector<8x128xf32>
    %c0_3 = arith.constant 0 : index
    %c0_4 = arith.constant 0 : index
    %3 = vector.load %arg4[%c0_3, %c0_4] : memref<1x128xf32, #tpu.memory_space<vmem>>, vector<1x128xf32>
    %4 = vector.broadcast %3 : vector<1x128xf32> to vector<8x128xf32>
    %5 = arith.addf %2, %4 : vector<8x128xf32>
    %6 = math.tanh %5 : vector<8x128xf32>
    %c0_5 = arith.constant 0 : index
    %c0_6 = arith.constant 0 : index
    %7 = vector.load %arg5[%c0_5, %c0_6] : memref<8x128xf32, #tpu.memory_space<vmem>>, vector<8x128xf32>
    tpu.vector_store %arg5[%c0_5, %c0_6], %6 {strides = array<i32>} : memref<8x128xf32, #tpu.memory_space<vmem>>, vector<8x128xf32>,
    return
  }
  func.func @transform_0(%arg0: i32, %arg1: i32) -> (i32, i32) {
    %c0_i32 = arith.constant 0 : i32
    %c0_i32_0 = arith.constant 0 : i32
    return %arg0, %c0_i32 : i32, i32
  }
  func.func @transform_1(%arg0: i32, %arg1: i32) -> (i32, i32) {
    %c0_i32 = arith.constant 0 : i32
    %c0_i32_0 = arith.constant 0 : i32
    return %c0_i32, %arg1 : i32, i32
  }
  func.func @transform_2(%arg0: i32, %arg1: i32) -> (i32, i32) {
    %c0_i32 = arith.constant 0 : i32
    %c0_i32_0 = arith.constant 0 : i32
    return %c0_i32, %arg1 : i32, i32
  }
  func.func @transform_3(%arg0: i32, %arg1: i32) -> (i32, i32) {
    %c0_i32 = arith.constant 0 : i32
    return %arg0, %arg1 : i32, i32
  }
}

module attributes {stable_mosaic.version = 11 : i64} {
  func.func @_pooler_kernel(%arg0: i32, %arg1: i32, %arg2: memref<8x128xf32, #tpu.memory_space<vmem>>, %arg3: memref<128x128xf32, #tpu.memory_space<vmem>>, %arg4: memref<1x128xf32, #tpu.memory_space<vmem>>, %arg5: memref<8x128xf32, #tpu.memory_space<vmem>>) attributes {dimension_semantics = [#tpu.dimension_semantics<parallel>, #tpu.dimension_semantics<parallel>], iteration_bounds = array<i64: 2, 1>, scalar_prefetch = 0 : i64, scratch_operands = 0 : i64, tpu.core_type = #tpu.core_type<tc>, window_params = [{transform_indices = @transform_0, window_bounds = array<i64: 8, 128>}, {transform_indices = @transform_1, window_bounds = array<i64: 128, 128>}, {transform_indices = @transform_2, window_bounds = array<i64: 1, 128>}, {transform_indices = @transform_3, window_bounds = array<i64: 8, 128>}]} {
    %c0 = arith.constant 0 : index
    %c0_0 = arith.constant 0 : index
    %0 = vector.load %arg2[%c0, %c0_0] : memref<8x128xf32, #tpu.memory_space<vmem>>, vector<8x128xf32>
    %c0_1 = arith.constant 0 : index
    %c0_2 = arith.constant 0 : index
    %1 = vector.load %arg3[%c0_1, %c0_2] : memref<128x128xf32, #tpu.memory_space<vmem>>, vector<128x128xf32>
    %cst = arith.constant dense<0.000000e+00> : vector<8x128xf32>
    %2 = tpu.matmul %0, %1, %cst {dimension_numbers = #tpu.dot_dimension_numbers<[1], [0], [0], [1], [0, 0, 1, 1], [], []>} : vector<8x128xf32>, vector<128x128xf32>, vector<8x128xf32> -> vector<8x128xf32>
    %c0_3 = arith.constant 0 : index
    %c0_4 = arith.constant 0 : index
    %3 = vector.load %arg4[%c0_3, %c0_4] : memref<1x128xf32, #tpu.memory_space<vmem>>, vector<1x128xf32>
    %4 = vector.broadcast %3 : vector<1x128xf32> to vector<8x128xf32>
    %5 = arith.addf %2, %4 : vector<8x128xf32>
    %6 = math.tanh %5 : vector<8x128xf32>
    %c0_5 = arith.constant 0 : index
    %c0_6 = arith.constant 0 : index
    %7 = vector.load %arg5[%c0_5, %c0_6] : memref<8x128xf32, #tpu.memory_space<vmem>>, vector<8x128xf32>
    tpu.vector_store %arg5[%c0_5, %c0_6], %6 {strides = array<i32>} : memref<8x128xf32, #tpu.memory_space<vmem>>, vector<8x128xf32>,
    return
  }
  func.func @transform_0(%arg0: i32, %arg1: i32) -> (i32, i32) {
    %c0_i32 = arith.constant 0 : i32
    %c0_i32_0 = arith.constant 0 : i32
    return %arg0, %c0_i32 : i32, i32
  }
  func.func @transform_1(%arg0: i32, %arg1: i32) -> (i32, i32) {
    %c0_i32 = arith.constant 0 : i32
    %c0_i32_0 = arith.constant 0 : i32
    return %c0_i32, %arg1 : i32, i32
  }
  func.func @transform_2(%arg0: i32, %arg1: i32) -> (i32, i32) {
    %c0_i32 = arith.constant 0 : i32
    %c0_i32_0 = arith.constant 0 : i32
    return %c0_i32, %arg1 : i32, i32
  }
  func.func @transform_3(%arg0: i32, %arg1: i32) -> (i32, i32) {
    %c0_i32 = arith.constant 0 : i32
    return %arg0, %arg1 : i32, i32
  }
}

</mosaic_0001>

<llo_original>
// kernel: tpu_custom_call.1
$region0: #{tpu_custom_call.1}
  #allocation0 [shape = 'u32[]', space=smem, size = 0x4, offset = 0x4, fixed_abs, tag = 'smem constant byte address 0x4 - core index']
  #allocation1 [shape = 'u32[144,128]{1,0:T(1,128)}', space=vmem, size = 0x12000, scoped, tag = 'internal scratch']
  %s0 = inlined_call_operand.hbm [shape: f32[16,1024], index: 0, kind: input, shape index: {}]
  %s1 = inlined_call_operand.hbm [shape: f32[128,128], index: 1, kind: input, shape index: {}]
  %s2 = inlined_call_operand.vmem [shape: f32[1,128], index: 2, kind: input, shape index: {}]
  %s3 = inlined_call_operand.hbm [shape: f32[16,128], index: 3, kind: output, shape index: {}]
  %s4 = sld [smem:[#allocation0]]
  $region53: #{tpu_custom_call.1} parent=0
    _
  %s6 = ssub.s32 1, %s4
  %s7 = scalar_select 0, %s6, %s4
  $region1: #{tpu_custom_call.1} parent=0
    #allocation2 [shape = 'u8[8192]{0}', space=vmem, size = 0x2000, scoped, tag = 'input window, operand 0']
    #allocation3 [shape = 's32[2]{0}', space=sflag, size = 0x8, scoped, tag = 'scoped memory for tpu_custom_call.1']
    #allocation4 [shape = 's32[2]{0}', space=sflag, size = 0x8, scoped, tag = 'scoped memory for tpu_custom_call.1']
    #allocation5 [shape = 'u8[65536]{0}', space=vmem, size = 0x10000, scoped, tag = 'input window, operand 1, single buffered']
    #allocation6 [shape = 's32[1]{0}', space=sflag, size = 0x4, scoped, tag = 'scoped memory for tpu_custom_call.1']
    #allocation7 [shape = 'u8[8192]{0}', space=vmem, size = 0x2000, scoped, tag = 'output window, operand 0']
    %8 = vsyncpa [#allocation3], 0
    %s9 = scalar_lea.sflag [#allocation3], 1
    %10 = vsyncpa %s9, 0
    %11 = vsyncpa [#allocation6], 0
    %12 = vsyncpa [#allocation4], 0
    %s13 = scalar_lea.sflag [#allocation4], 1
    %14 = vsyncpa %s13, 0
    loop: start=0, step=1, limit=4
    $region2: #{tpu_custom_call.1} parent=1 // loop_pre_header
      _
    $region3: #{tpu_custom_call.1} parent=1 // loop_header
      %s16 = sphi 0, %s20
      %p17 = scmp.ge.s32.totalorder %s16, 4
      %s23 = sphi 0, %s35
      %s24 = sphi 0, %s31
      %s25 = sphi 0, %s23
      %s26 = sphi 0, %s24
      %s27 = sphi 0, %s25
      %s28 = sphi 0, %s26
      %s38 = sphi 0, %s40
      %s41 = sphi 0, %s38
      %s42 = sphi 0, %s41
      %s58 = sphi 0, %s42
      %s64 = sphi 0, %s66
      %s67 = sphi 0, %s64
      %s68 = sphi 0, %s67
      %s84 = sphi 0, %s68
      %s90 = sphi 0, %s92
      %s93 = sphi 0, %s90
      %s94 = sphi 0, %s93
      %s110 = sphi 0, %s94
      %s118 = sphi 0, %s120
      %s121 = sphi 0, %s118
      %s122 = sphi 0, %s121
      %s138 = sphi 0, %s122
    $region4: #{tpu_custom_call.1} parent=1 // loop_header_branch
      %19 = sbr.rel (%p17) target = $region8
    $region5: #{tpu_custom_call.1} parent=1 // loop_body
      %s21 = ssub.s32 %s16, 1
      %s22 = ssub.s32 %s16, 2
      %s29 = sadd.s32 1, %s24
      %p30 = scmp.ge.s32.totalorder %s29, 1
      %s31 = scalar_select %p30, 0, %s29
      %s32 = sadd.s32 1, %s23
      %s33 = scalar_select %p30, %s32, %s23
      %p34 = scmp.ge.s32.totalorder %s33, 2
      %s35 = scalar_select %p34, 0, %s33
      %s36 = ssub.s32 %s23, %s35
      %p37 = scmp.eq.s32.totalorder %s36, 0
      %s39 = sadd.s32 %s38, 1
      %s40 = scalar_select %p37, %s38, %s39
      %p43 = pneg %p37
      %p44 = scmp.eq.s32.totalorder %s16, 1
      %p45 = por %p43, %p44
      %p46 = scmp.ne.s32.totalorder %s38, %s41
      %p47 = scmp.eq.s32.totalorder %s16, 0
      %p48 = por %p46, %p47
      %p49 = scmp.ne.s32.totalorder %s38, %s41
      %p50 = scmp.eq.s32.totalorder %s21, 1
      %p51 = por %p49, %p50
      %p52 = scmp.ne.s32.totalorder %s41, %s42
      %p53 = scmp.eq.s32.totalorder %s21, 0
      %p54 = por %p52, %p53
      %p55 = scmp.ne.s32.totalorder %s41, %s42
      %p56 = scmp.eq.s32.totalorder %s22, 1
      %p57 = por %p55, %p56
      %p59 = scmp.ne.s32.totalorder %s42, %s58
      %p60 = scmp.eq.s32.totalorder %s22, 0
      %p61 = por %p59, %p60
      %s62 = ssub.s32 %s24, %s31
      %p63 = scmp.eq.s32.totalorder %s62, 0
      %s65 = sadd.s32 %s64, 1
      %s66 = scalar_select %p63, %s64, %s65
      %p69 = pneg %p63
      %p70 = scmp.eq.s32.totalorder %s16, 1
      %p71 = por %p69, %p70
      %p72 = scmp.ne.s32.totalorder %s64, %s67
      %p73 = scmp.eq.s32.totalorder %s16, 0
      %p74 = por %p72, %p73
      %p75 = scmp.ne.s32.totalorder %s64, %s67
      %p76 = scmp.eq.s32.totalorder %s21, 1
      %p77 = por %p75, %p76
      %p78 = scmp.ne.s32.totalorder %s67, %s68
      %p79 = scmp.eq.s32.totalorder %s21, 0
      %p80 = por %p78, %p79
      %p81 = scmp.ne.s32.totalorder %s67, %s68
      %p82 = scmp.eq.s32.totalorder %s22, 1
      %p83 = por %p81, %p82
      %p85 = scmp.ne.s32.totalorder %s68, %s84
      %p86 = scmp.eq.s32.totalorder %s22, 0
      %p87 = por %p85, %p86
      %s88 = ssub.s32 %s24, %s31
      %p89 = scmp.eq.s32.totalorder %s88, 0
      %s91 = sadd.s32 %s90, 1
      %s92 = scalar_select %p89, %s90, %s91
      %p95 = pneg %p89
      %p96 = scmp.eq.s32.totalorder %s16, 1
      %p97 = por %p95, %p96
      %p98 = scmp.ne.s32.totalorder %s90, %s93
      %p99 = scmp.eq.s32.totalorder %s16, 0
      %p100 = por %p98, %p99
      %p101 = scmp.ne.s32.totalorder %s90, %s93
      %p102 = scmp.eq.s32.totalorder %s21, 1
      %p103 = por %p101, %p102
      %p104 = scmp.ne.s32.totalorder %s93, %s94
      %p105 = scmp.eq.s32.totalorder %s21, 0
      %p106 = por %p104, %p105
      %p107 = scmp.ne.s32.totalorder %s93, %s94
      %p108 = scmp.eq.s32.totalorder %s22, 1
      %p109 = por %p107, %p108
      %p111 = scmp.ne.s32.totalorder %s94, %s110
      %p112 = scmp.eq.s32.totalorder %s22, 0
      %p113 = por %p111, %p112
      %s114 = ssub.s32 %s23, %s35
      %s115 = ssub.s32 %s24, %s31
      %s116 = sor.u32 %s114, %s115
      %p117 = scmp.eq.s32.totalorder %s116, 0
      %s119 = sadd.s32 %s118, 1
      %s120 = scalar_select %p117, %s118, %s119
      %p123 = pneg %p117
      %p124 = scmp.eq.s32.totalorder %s16, 1
      %p125 = por %p123, %p124
      %p126 = scmp.ne.s32.totalorder %s118, %s121
      %p127 = scmp.eq.s32.totalorder %s16, 0
      %p128 = por %p126, %p127
      %p129 = scmp.ne.s32.totalorder %s118, %s121
      %p130 = scmp.eq.s32.totalorder %s21, 1
      %p131 = por %p129, %p130
      %p132 = scmp.ne.s32.totalorder %s121, %s122
      %p133 = scmp.eq.s32.totalorder %s21, 0
      %p134 = por %p132, %p133
      %p135 = scmp.ne.s32.totalorder %s121, %s122
      %p136 = scmp.eq.s32.totalorder %s22, 1
      %p137 = por %p135, %p136
      %p139 = scmp.ne.s32.totalorder %s122, %s138
      %p140 = scmp.eq.s32.totalorder %s22, 0
      %p141 = por %p139, %p140
      %p142 = scmp.le.s32.totalorder 1, %s16
      %p143 = scmp.lt.s32.totalorder %s16, 3
      %p144 = pnand %p142, %p143
      %p145 = pneg %p144
      // Predicated region
      $region9: #{tpu_custom_call.1} parent=5 // pred_check
        _
      $region10: #{tpu_custom_call.1} parent=5 // pred_check_branch
        %147 = sbr.rel (%p144) target = $region12
      $region11: #{tpu_custom_call.1} parent=5 // pred_region
        %s148 = ssub.s32 %s16, 1
        // Predicated region
        $region13: #{tpu_custom_call.1} parent=11 // pred_check
          %p149 = pneg %p80
        $region14: #{tpu_custom_call.1} parent=11 // pred_check_branch
          %151 = sbr.rel (%p149) target = $region16
        $region15: #{tpu_custom_call.1} parent=11 // pred_region
          %s153 = ssub.s32 2048, 2048
          %154 = vsyncadd [#allocation6], %s153
          %s155 = smul.addr %s26, 128
          %s156 = scalar_lea.hbm %s1, %s155
          %s157 = sshll.u32 [#allocation5], 4
          %s158 = int_to_ptr.vmem [resolvable:$true] %s157
          %163 = dma.hbm_to_vmem [thread:$0]  %s156, 2048, %s158, [#allocation6], 128, 128, 8
        $region16: #{tpu_custom_call.1} parent=11 // pred_fallthru
          _
        // Predicated region
        $region17: #{tpu_custom_call.1} parent=11 // pred_check
          %p164 = pneg %p106
        $region18: #{tpu_custom_call.1} parent=11 // pred_check_branch
          %166 = sbr.rel (%p164) target = $region20
        $region19: #{tpu_custom_call.1} parent=11 // pred_region
          %p167 = scmp.lt.s32.totalorder %s26, 0
          %s168 = scalar_select %p167, %s26, 0
          %s169 = scalar_lea.vmem %s2, %s168
        $region20: #{tpu_custom_call.1} parent=11 // pred_fallthru
          _
      $region12: #{tpu_custom_call.1} parent=5 // pred_fallthru
        _
      %p170 = scmp.lt.s32.totalorder %s16, 2
      // Predicated region
      $region21: #{tpu_custom_call.1} parent=5 // pred_check
        %p171 = pneg %p170
      $region22: #{tpu_custom_call.1} parent=5 // pred_check_branch
        %173 = sbr.rel (%p171) target = $region24
      $region23: #{tpu_custom_call.1} parent=5 // pred_region
        // Predicated region
        $region25: #{tpu_custom_call.1} parent=23 // pred_check
          %p174 = pneg %p48
        $region26: #{tpu_custom_call.1} parent=23 // pred_check_branch
          %176 = sbr.rel (%p174) target = $region28
        $region27: #{tpu_custom_call.1} parent=23 // pred_region
          %s177 = sand.u32 %s38, 1
          %s178 = scalar_lea.sflag [#allocation3], %s177
          %s179 = sand.u32 %s38, 1
          %s180 = smul.addr %s179, 8
          %s181 = scalar_lea.vmem [#allocation2], %s180
          %s183 = ssub.s32 128, 128
          %184 = vsyncadd %s178, %s183
          %s185 = smul.addr %s23, 8
          %s186 = smul.addr %s185, 128
          %s187 = scalar_lea.hbm %s0, %s186
          %s189 = sshll.u32 %s181, 4
          %s190 = int_to_ptr.vmem [resolvable:$true] %s189
          %192 = dma.hbm_to_vmem [thread:$0]  %s187, 128, %s190, %s178
        $region28: #{tpu_custom_call.1} parent=23 // pred_fallthru
          _
      $region24: #{tpu_custom_call.1} parent=5 // pred_fallthru
        _
      %p193 = scmp.le.s32.totalorder 1, %s16
      %p194 = scmp.lt.s32.totalorder %s16, 3
      %p195 = pnand %p193, %p194
      %p196 = pneg %p195
      // Predicated region
      $region29: #{tpu_custom_call.1} parent=5 // pred_check
        _
      $region30: #{tpu_custom_call.1} parent=5 // pred_check_branch
        %198 = sbr.rel (%p195) target = $region32
      $region31: #{tpu_custom_call.1} parent=5 // pred_region
        %s199 = ssub.s32 %s16, 1
        %s200 = sand.u32 %s41, 1
        %s201 = scalar_lea.sflag [#allocation3], %s200
        %s202 = sand.u32 %s41, 1
        %s203 = smul.addr %s202, 8
        %s204 = scalar_lea.vmem [#allocation2], %s203
        // Predicated region
        $region33: #{tpu_custom_call.1} parent=31 // pred_check
          %p205 = pneg %p54
        $region34: #{tpu_custom_call.1} parent=31 // pred_check_branch
          %207 = sbr.rel (%p205) target = $region36
        $region35: #{tpu_custom_call.1} parent=31 // pred_region
          %208 = dma.done %s201, 128
        $region36: #{tpu_custom_call.1} parent=31 // pred_fallthru
          _
        // Predicated region
        $region37: #{tpu_custom_call.1} parent=31 // pred_check
          %p209 = pneg %p80
        $region38: #{tpu_custom_call.1} parent=31 // pred_check_branch
          %211 = sbr.rel (%p209) target = $region40
        $region39: #{tpu_custom_call.1} parent=31 // pred_region
          %212 = dma.done [#allocation6], 2048
        $region40: #{tpu_custom_call.1} parent=31 // pred_fallthru
          _
        %s213 = sand.u32 %s41, 1
        %s214 = scalar_lea.sflag [#allocation3], %s213
        %s215 = sand.u32 %s41, 1
        %s216 = smul.addr %s215, 8
        %s217 = scalar_lea.vmem [#allocation2], %s216
        %p218 = pneg %p54
        %p219 = pneg %p51
        %p220 = pneg %p80
        %p221 = pneg %p77
        %p222 = scmp.lt.s32.totalorder %s26, 0
        %s223 = scalar_select %p222, %s26, 0
        %s224 = scalar_lea.vmem %s2, %s223
        %p225 = pneg %p106
        %p226 = pneg %p103
        %p227 = pneg %p134
        %p228 = pneg %p131
        %s229 = sand.u32 %s121, 1
        %s230 = scalar_lea.sflag [#allocation4], %s229
        %s231 = sand.u32 %s121, 1
        %s232 = smul.addr %s231, 8
        %s233 = scalar_lea.vmem [#allocation7], %s232
        %p234 = scmp.lt.s32.totalorder %s26, 0
        %s235 = scalar_select %p234, %s26, 0
        %s236 = scalar_lea.vmem %s2, %s235
        %v237 = vld [vmem:[%s204] sm:$0xff]
        %v238 = vld [vmem:[#allocation5] sm:$0xff]
        %v239 = vld [vmem:[#allocation5 + $0x8] sm:$0xff]
        %v240 = vld [vmem:[#allocation5 + $0x10] sm:$0xff]
        %v241 = vld [vmem:[#allocation5 + $0x18] sm:$0xff]
        %v242 = vld [vmem:[#allocation5 + $0x20] sm:$0xff]
        %v243 = vld [vmem:[#allocation5 + $0x28] sm:$0xff]
        %v244 = vld [vmem:[#allocation5 + $0x30] sm:$0xff]
        %v245 = vld [vmem:[#allocation5 + $0x38] sm:$0xff]
        %v246 = vld [vmem:[#allocation5 + $0x40] sm:$0xff]
        %v247 = vld [vmem:[#allocation5 + $0x48] sm:$0xff]
        %v248 = vld [vmem:[#allocation5 + $0x50] sm:$0xff]
        %v249 = vld [vmem:[#allocation5 + $0x58] sm:$0xff]
        %v250 = vld [vmem:[#allocation5 + $0x60] sm:$0xff]
        %v251 = vld [vmem:[#allocation5 + $0x68] sm:$0xff]
        %v252 = vld [vmem:[#allocation5 + $0x70] sm:$0xff]
        %v253 = vld [vmem:[#allocation5 + $0x78] sm:$0xff]
        %v254 = vld [vmem:[%s236] sm:$0x1]
        %v256 = vlaneseq
        %v257 = vshrl.u32 %v256, 7
        %v258 = vsub.s32 0, %v257
        %v259 = vrot.slane %v254, %v258
        %261 = vmatprep.subr.mxu0 0.0
        %262 = vmatpush1.msra.mxu0 %v238
        %263 = vmatprep.subr.mxu0 0.0
        %264 = vmatpush1.msra.mxu0 %v239
        %265 = vmatprep.subr.mxu0 0.0
        %266 = vmatpush1.msra.mxu0 %v240
        %267 = vmatprep.subr.mxu0 0.0
        %268 = vmatpush1.msra.mxu0 %v241
        %269 = vmatprep.subr.mxu0 0.0
        %270 = vmatpush1.msra.mxu0 %v242
        %271 = vmatprep.subr.mxu0 0.0
        %272 = vmatpush1.msra.mxu0 %v243
        %273 = vmatprep.subr.mxu0 0.0
        %274 = vmatpush1.msra.mxu0 %v244
        %275 = vmatprep.subr.mxu0 0.0
        %276 = vmatpush1.msra.mxu0 %v245
        %277 = vmatprep.subr.mxu0 0.0
        %278 = vmatpush1.msra.mxu0 %v246
        %279 = vmatprep.subr.mxu0 0.0
        %280 = vmatpush1.msra.mxu0 %v247
        %281 = vmatprep.subr.mxu0 0.0
        %282 = vmatpush1.msra.mxu0 %v248
        %283 = vmatprep.subr.mxu0 0.0
        %284 = vmatpush1.msra.mxu0 %v249
        %285 = vmatprep.subr.mxu0 0.0
        %286 = vmatpush1.msra.mxu0 %v250
        %287 = vmatprep.subr.mxu0 0.0
        %288 = vmatpush1.msra.mxu0 %v251
        %289 = vmatprep.subr.mxu0 0.0
        %290 = vmatpush1.msra.mxu0 %v252
        %291 = vmatprep.subr.mxu0 0.0
        %292 = vmatpush1.msra.mxu0 %v253
        %293 = vmatprep.subr.mxu0 0.0
        %294 = vmatpush1.msra.mxu0 0.0
        %295 = vmatprep.subr.mxu0 0.0
        %296 = vmatpush1.msra.mxu0 0.0
        %297 = vmatprep.subr.mxu0 0.0
        %298 = vmatpush1.msra.mxu0 0.0
        %299 = vmatprep.subr.mxu0 0.0
        %300 = vmatpush1.msra.mxu0 0.0
        %301 = vmatprep.subr.mxu0 0.0
        %302 = vmatpush1.msra.mxu0 0.0
        %303 = vmatprep.subr.mxu0 0.0
        %304 = vmatpush1.msra.mxu0 0.0
        %305 = vmatprep.subr.mxu0 0.0
        %306 = vmatpush1.msra.mxu0 0.0
        %307 = vmatprep.subr.mxu0 0.0
        %308 = vmatpush1.msra.mxu0 0.0
        %309 = vmatprep.subr.mxu0 0.0
        %310 = vmatpush1.msra.mxu0 0.0
        %311 = vmatprep.subr.mxu0 0.0
        %312 = vmatpush1.msra.mxu0 0.0
        %313 = vmatprep.subr.mxu0 0.0
        %314 = vmatpush1.msra.mxu0 0.0
        %315 = vmatprep.subr.mxu0 0.0
        %316 = vmatpush1.msra.mxu0 0.0
        %317 = vmatprep.subr.mxu0 0.0
        %318 = vmatpush1.msra.mxu0 0.0
        %319 = vmatprep.subr.mxu0 0.0
        %320 = vmatpush1.msra.mxu0 0.0
        %321 = vmatprep.subr.mxu0 0.0
        %322 = vmatpush1.msra.mxu0 0.0
        %323 = vmatprep.subr.mxu0 0.0
        %324 = vmatpush1.msra.mxu0 0.0
        %325 = vmatprep.mubr.f32.mxu0 0.0
        %326 = vmatmul.mubr.f32.gmra.mrb[0].mxu0 %v237
        %v327 = vpop.f32.mrb[0].mxu0
        %v328 = vadd.f32 %v259, %v327
        %v329 = vpop.f32.mrb[0].mxu0
        %330 = vdwg.mxu0
        %v331 = vtanh.pop %v328
        %332 = vst [vmem:[%s233] sm:$0xff] %v331
        %s333 = sand.u32 %s121, 1
        %s334 = scalar_lea.sflag [#allocation4], %s333
        %s335 = sand.u32 %s121, 1
        %s336 = smul.addr %s335, 8
        %s337 = scalar_lea.vmem [#allocation7], %s336
        // Predicated region
        $region41: #{tpu_custom_call.1} parent=31 // pred_check
          %p338 = pneg %p131
        $region42: #{tpu_custom_call.1} parent=31 // pred_check_branch
          %340 = sbr.rel (%p338) target = $region44
        $region43: #{tpu_custom_call.1} parent=31 // pred_region
          %s342 = ssub.s32 128, 128
          %343 = vsyncadd %s334, %s342
          %s344 = sadd.s32 %s26, %s25
          %s345 = smul.addr %s344, 128
          %s346 = scalar_lea.hbm %s3, %s345
          %s348 = sshll.u32 %s337, 4
          %s349 = int_to_ptr.vmem [resolvable:$true] %s348
          %351 = dma.vmem_to_hbm [thread:$0]  %s349, 128, %s346, %s334
        $region44: #{tpu_custom_call.1} parent=31 // pred_fallthru
          _
      $region32: #{tpu_custom_call.1} parent=5 // pred_fallthru
        _
      %p352 = scmp.le.s32.totalorder 2, %s16
      // Predicated region
      $region45: #{tpu_custom_call.1} parent=5 // pred_check
        %p353 = pneg %p352
      $region46: #{tpu_custom_call.1} parent=5 // pred_check_branch
        %355 = sbr.rel (%p353) target = $region48
      $region47: #{tpu_custom_call.1} parent=5 // pred_region
        %s356 = ssub.s32 %s16, 2
        // Predicated region
        $region49: #{tpu_custom_call.1} parent=47 // pred_check
          %p357 = pneg %p137
        $region50: #{tpu_custom_call.1} parent=47 // pred_check_branch
          %359 = sbr.rel (%p357) target = $region52
        $region51: #{tpu_custom_call.1} parent=47 // pred_region
          %s360 = sand.u32 %s122, 1
          %s361 = scalar_lea.sflag [#allocation4], %s360
          %s362 = sand.u32 %s122, 1
          %s363 = smul.addr %s362, 8
          %s364 = scalar_lea.vmem [#allocation7], %s363
          %365 = dma.done %s361, 128
        $region52: #{tpu_custom_call.1} parent=47 // pred_fallthru
          _
      $region48: #{tpu_custom_call.1} parent=5 // pred_fallthru
        _
    $region6: #{tpu_custom_call.1} parent=1 // loop_footer
      %s20 = sadd.s32 1, %s16
    $region7: #{tpu_custom_call.1} parent=1 // loop_footer_branch
      %15 = sbr.rel target = $region3
    $region8: #{tpu_custom_call.1} parent=1 // loop_exit
      _
    %366 = vsyncpa [#allocation3], 1
    %s367 = scalar_lea.sflag [#allocation3], 1
    %368 = vsyncpa %s367, 1
    %369 = vsyncpa [#allocation6], 1
    %370 = vsyncpa [#allocation4], 1
    %s371 = scalar_lea.sflag [#allocation4], 1
    %372 = vsyncpa %s371, 1

// kernel: tpu_custom_call.1
$region0: #{tpu_custom_call.1}
  #allocation0 [shape = 'u32[]', space=smem, size = 0x4, offset = 0x4, fixed_abs, tag = 'smem constant byte address 0x4 - core index']
  #allocation1 [shape = 'u32[144,128]{1,0:T(1,128)}', space=vmem, size = 0x12000, scoped, tag = 'internal scratch']
  %s0 = inlined_call_operand.hbm [shape: f32[16,1024], index: 0, kind: input, shape index: {}]
  %s1 = inlined_call_operand.hbm [shape: f32[128,128], index: 1, kind: input, shape index: {}]
  %s2 = inlined_call_operand.vmem [shape: f32[1,128], index: 2, kind: input, shape index: {}]
  %s3 = inlined_call_operand.hbm [shape: f32[16,128], index: 3, kind: output, shape index: {}]
  %s4 = sld [smem:[#allocation0]]
  $region53: #{tpu_custom_call.1} parent=0
    _
  %s6 = ssub.s32 1, %s4
  %s7 = scalar_select 0, %s6, %s4
  $region1: #{tpu_custom_call.1} parent=0
    #allocation2 [shape = 'u8[8192]{0}', space=vmem, size = 0x2000, scoped, tag = 'input window, operand 0']
    #allocation3 [shape = 's32[2]{0}', space=sflag, size = 0x8, scoped, tag = 'scoped memory for tpu_custom_call.1']
    #allocation4 [shape = 's32[2]{0}', space=sflag, size = 0x8, scoped, tag = 'scoped memory for tpu_custom_call.1']
    #allocation5 [shape = 'u8[65536]{0}', space=vmem, size = 0x10000, scoped, tag = 'input window, operand 1, single buffered']
    #allocation6 [shape = 's32[1]{0}', space=sflag, size = 0x4, scoped, tag = 'scoped memory for tpu_custom_call.1']
    #allocation7 [shape = 'u8[8192]{0}', space=vmem, size = 0x2000, scoped, tag = 'output window, operand 0']
    %8 = vsyncpa [#allocation3], 0
    %s9 = scalar_lea.sflag [#allocation3], 1
    %10 = vsyncpa %s9, 0
    %11 = vsyncpa [#allocation6], 0
    %12 = vsyncpa [#allocation4], 0
    %s13 = scalar_lea.sflag [#allocation4], 1
    %14 = vsyncpa %s13, 0
    loop: start=0, step=1, limit=4
    $region2: #{tpu_custom_call.1} parent=1 // loop_pre_header
      _
    $region3: #{tpu_custom_call.1} parent=1 // loop_header
      %s16 = sphi 0, %s20
      %p17 = scmp.ge.s32.totalorder %s16, 4
      %s23 = sphi 0, %s35
      %s24 = sphi 0, %s31
      %s25 = sphi 0, %s23
      %s26 = sphi 0, %s24
      %s27 = sphi 0, %s25
      %s28 = sphi 0, %s26
      %s38 = sphi 0, %s40
      %s41 = sphi 0, %s38
      %s42 = sphi 0, %s41
      %s58 = sphi 0, %s42
      %s64 = sphi 0, %s66
      %s67 = sphi 0, %s64
      %s68 = sphi 0, %s67
      %s84 = sphi 0, %s68
      %s90 = sphi 0, %s92
      %s93 = sphi 0, %s90
      %s94 = sphi 0, %s93
      %s110 = sphi 0, %s94
      %s118 = sphi 0, %s120
      %s121 = sphi 0, %s118
      %s122 = sphi 0, %s121
      %s138 = sphi 0, %s122
    $region4: #{tpu_custom_call.1} parent=1 // loop_header_branch
      %19 = sbr.rel (%p17) target = $region8
    $region5: #{tpu_custom_call.1} parent=1 // loop_body
      %s21 = ssub.s32 %s16, 1
      %s22 = ssub.s32 %s16, 2
      %s29 = sadd.s32 1, %s24
      %p30 = scmp.ge.s32.totalorder %s29, 1
      %s31 = scalar_select %p30, 0, %s29
      %s32 = sadd.s32 1, %s23
      %s33 = scalar_select %p30, %s32, %s23
      %p34 = scmp.ge.s32.totalorder %s33, 2
      %s35 = scalar_select %p34, 0, %s33
      %s36 = ssub.s32 %s23, %s35
      %p37 = scmp.eq.s32.totalorder %s36, 0
      %s39 = sadd.s32 %s38, 1
      %s40 = scalar_select %p37, %s38, %s39
      %p43 = pneg %p37
      %p44 = scmp.eq.s32.totalorder %s16, 1
      %p45 = por %p43, %p44
      %p46 = scmp.ne.s32.totalorder %s38, %s41
      %p47 = scmp.eq.s32.totalorder %s16, 0
      %p48 = por %p46, %p47
      %p49 = scmp.ne.s32.totalorder %s38, %s41
      %p50 = scmp.eq.s32.totalorder %s21, 1
      %p51 = por %p49, %p50
      %p52 = scmp.ne.s32.totalorder %s41, %s42
      %p53 = scmp.eq.s32.totalorder %s21, 0
      %p54 = por %p52, %p53
      %p55 = scmp.ne.s32.totalorder %s41, %s42
      %p56 = scmp.eq.s32.totalorder %s22, 1
      %p57 = por %p55, %p56
      %p59 = scmp.ne.s32.totalorder %s42, %s58
      %p60 = scmp.eq.s32.totalorder %s22, 0
      %p61 = por %p59, %p60
      %s62 = ssub.s32 %s24, %s31
      %p63 = scmp.eq.s32.totalorder %s62, 0
      %s65 = sadd.s32 %s64, 1
      %s66 = scalar_select %p63, %s64, %s65
      %p69 = pneg %p63
      %p70 = scmp.eq.s32.totalorder %s16, 1
      %p71 = por %p69, %p70
      %p72 = scmp.ne.s32.totalorder %s64, %s67
      %p73 = scmp.eq.s32.totalorder %s16, 0
      %p74 = por %p72, %p73
      %p75 = scmp.ne.s32.totalorder %s64, %s67
      %p76 = scmp.eq.s32.totalorder %s21, 1
      %p77 = por %p75, %p76
      %p78 = scmp.ne.s32.totalorder %s67, %s68
      %p79 = scmp.eq.s32.totalorder %s21, 0
      %p80 = por %p78, %p79
      %p81 = scmp.ne.s32.totalorder %s67, %s68
      %p82 = scmp.eq.s32.totalorder %s22, 1
      %p83 = por %p81, %p82
      %p85 = scmp.ne.s32.totalorder %s68, %s84
      %p86 = scmp.eq.s32.totalorder %s22, 0
      %p87 = por %p85, %p86
      %s88 = ssub.s32 %s24, %s31
      %p89 = scmp.eq.s32.totalorder %s88, 0
      %s91 = sadd.s32 %s90, 1
      %s92 = scalar_select %p89, %s90, %s91
      %p95 = pneg %p89
      %p96 = scmp.eq.s32.totalorder %s16, 1
      %p97 = por %p95, %p96
      %p98 = scmp.ne.s32.totalorder %s90, %s93
      %p99 = scmp.eq.s32.totalorder %s16, 0
      %p100 = por %p98, %p99
      %p101 = scmp.ne.s32.totalorder %s90, %s93
      %p102 = scmp.eq.s32.totalorder %s21, 1
      %p103 = por %p101, %p102
      %p104 = scmp.ne.s32.totalorder %s93, %s94
      %p105 = scmp.eq.s32.totalorder %s21, 0
      %p106 = por %p104, %p105
      %p107 = scmp.ne.s32.totalorder %s93, %s94
      %p108 = scmp.eq.s32.totalorder %s22, 1
      %p109 = por %p107, %p108
      %p111 = scmp.ne.s32.totalorder %s94, %s110
      %p112 = scmp.eq.s32.totalorder %s22, 0
      %p113 = por %p111, %p112
      %s114 = ssub.s32 %s23, %s35
      %s115 = ssub.s32 %s24, %s31
      %s116 = sor.u32 %s114, %s115
      %p117 = scmp.eq.s32.totalorder %s116, 0
      %s119 = sadd.s32 %s118, 1
      %s120 = scalar_select %p117, %s118, %s119
      %p123 = pneg %p117
      %p124 = scmp.eq.s32.totalorder %s16, 1
      %p125 = por %p123, %p124
      %p126 = scmp.ne.s32.totalorder %s118, %s121
      %p127 = scmp.eq.s32.totalorder %s16, 0
      %p128 = por %p126, %p127
      %p129 = scmp.ne.s32.totalorder %s118, %s121
      %p130 = scmp.eq.s32.totalorder %s21, 1
      %p131 = por %p129, %p130
      %p132 = scmp.ne.s32.totalorder %s121, %s122
      %p133 = scmp.eq.s32.totalorder %s21, 0
      %p134 = por %p132, %p133
      %p135 = scmp.ne.s32.totalorder %s121, %s122
      %p136 = scmp.eq.s32.totalorder %s22, 1
      %p137 = por %p135, %p136
      %p139 = scmp.ne.s32.totalorder %s122, %s138
      %p140 = scmp.eq.s32.totalorder %s22, 0
      %p141 = por %p139, %p140
      %p142 = scmp.le.s32.totalorder 1, %s16
      %p143 = scmp.lt.s32.totalorder %s16, 3
      %p144 = pnand %p142, %p143
      %p145 = pneg %p144
      // Predicated region
      $region9: #{tpu_custom_call.1} parent=5 // pred_check
        _
      $region10: #{tpu_custom_call.1} parent=5 // pred_check_branch
        %147 = sbr.rel (%p144) target = $region12
      $region11: #{tpu_custom_call.1} parent=5 // pred_region
        %s148 = ssub.s32 %s16, 1
        // Predicated region
        $region13: #{tpu_custom_call.1} parent=11 // pred_check
          %p149 = pneg %p80
        $region14: #{tpu_custom_call.1} parent=11 // pred_check_branch
          %151 = sbr.rel (%p149) target = $region16
        $region15: #{tpu_custom_call.1} parent=11 // pred_region
          %s153 = ssub.s32 2048, 2048
          %154 = vsyncadd [#allocation6], %s153
          %s155 = smul.addr %s26, 128
          %s156 = scalar_lea.hbm %s1, %s155
          %s157 = sshll.u32 [#allocation5], 4
          %s158 = int_to_ptr.vmem [resolvable:$true] %s157
          %163 = dma.hbm_to_vmem [thread:$0]  %s156, 2048, %s158, [#allocation6], 128, 128, 8
        $region16: #{tpu_custom_call.1} parent=11 // pred_fallthru
          _
        // Predicated region
        $region17: #{tpu_custom_call.1} parent=11 // pred_check
          %p164 = pneg %p106
        $region18: #{tpu_custom_call.1} parent=11 // pred_check_branch
          %166 = sbr.rel (%p164) target = $region20
        $region19: #{tpu_custom_call.1} parent=11 // pred_region
          %p167 = scmp.lt.s32.totalorder %s26, 0
          %s168 = scalar_select %p167, %s26, 0
          %s169 = scalar_lea.vmem %s2, %s168
        $region20: #{tpu_custom_call.1} parent=11 // pred_fallthru
          _
      $region12: #{tpu_custom_call.1} parent=5 // pred_fallthru
        _
      %p170 = scmp.lt.s32.totalorder %s16, 2
      // Predicated region
      $region21: #{tpu_custom_call.1} parent=5 // pred_check
        %p171 = pneg %p170
      $region22: #{tpu_custom_call.1} parent=5 // pred_check_branch
        %173 = sbr.rel (%p171) target = $region24
      $region23: #{tpu_custom_call.1} parent=5 // pred_region
        // Predicated region
        $region25: #{tpu_custom_call.1} parent=23 // pred_check
          %p174 = pneg %p48
        $region26: #{tpu_custom_call.1} parent=23 // pred_check_branch
          %176 = sbr.rel (%p174) target = $region28
        $region27: #{tpu_custom_call.1} parent=23 // pred_region
          %s177 = sand.u32 %s38, 1
          %s178 = scalar_lea.sflag [#allocation3], %s177
          %s179 = sand.u32 %s38, 1
          %s180 = smul.addr %s179, 8
          %s181 = scalar_lea.vmem [#allocation2], %s180
          %s183 = ssub.s32 128, 128
          %184 = vsyncadd %s178, %s183
          %s185 = smul.addr %s23, 8
          %s186 = smul.addr %s185, 128
          %s187 = scalar_lea.hbm %s0, %s186
          %s189 = sshll.u32 %s181, 4
          %s190 = int_to_ptr.vmem [resolvable:$true] %s189
          %192 = dma.hbm_to_vmem [thread:$0]  %s187, 128, %s190, %s178
        $region28: #{tpu_custom_call.1} parent=23 // pred_fallthru
          _
      $region24: #{tpu_custom_call.1} parent=5 // pred_fallthru
        _
      %p193 = scmp.le.s32.totalorder 1, %s16
      %p194 = scmp.lt.s32.totalorder %s16, 3
      %p195 = pnand %p193, %p194
      %p196 = pneg %p195
      // Predicated region
      $region29: #{tpu_custom_call.1} parent=5 // pred_check
        _
      $region30: #{tpu_custom_call.1} parent=5 // pred_check_branch
        %198 = sbr.rel (%p195) target = $region32
      $region31: #{tpu_custom_call.1} parent=5 // pred_region
        %s199 = ssub.s32 %s16, 1
        %s200 = sand.u32 %s41, 1
        %s201 = scalar_lea.sflag [#allocation3], %s200
        %s202 = sand.u32 %s41, 1
        %s203 = smul.addr %s202, 8
        %s204 = scalar_lea.vmem [#allocation2], %s203
        // Predicated region
        $region33: #{tpu_custom_call.1} parent=31 // pred_check
          %p205 = pneg %p54
        $region34: #{tpu_custom_call.1} parent=31 // pred_check_branch
          %207 = sbr.rel (%p205) target = $region36
        $region35: #{tpu_custom_call.1} parent=31 // pred_region
          %208 = dma.done %s201, 128
        $region36: #{tpu_custom_call.1} parent=31 // pred_fallthru
          _
        // Predicated region
        $region37: #{tpu_custom_call.1} parent=31 // pred_check
          %p209 = pneg %p80
        $region38: #{tpu_custom_call.1} parent=31 // pred_check_branch
          %211 = sbr.rel (%p209) target = $region40
        $region39: #{tpu_custom_call.1} parent=31 // pred_region
          %212 = dma.done [#allocation6], 2048
        $region40: #{tpu_custom_call.1} parent=31 // pred_fallthru
          _
        %s213 = sand.u32 %s41, 1
        %s214 = scalar_lea.sflag [#allocation3], %s213
        %s215 = sand.u32 %s41, 1
        %s216 = smul.addr %s215, 8
        %s217 = scalar_lea.vmem [#allocation2], %s216
        %p218 = pneg %p54
        %p219 = pneg %p51
        %p220 = pneg %p80
        %p221 = pneg %p77
        %p222 = scmp.lt.s32.totalorder %s26, 0
        %s223 = scalar_select %p222, %s26, 0
        %s224 = scalar_lea.vmem %s2, %s223
        %p225 = pneg %p106
        %p226 = pneg %p103
        %p227 = pneg %p134
        %p228 = pneg %p131
        %s229 = sand.u32 %s121, 1
        %s230 = scalar_lea.sflag [#allocation4], %s229
        %s231 = sand.u32 %s121, 1
        %s232 = smul.addr %s231, 8
        %s233 = scalar_lea.vmem [#allocation7], %s232
        %p234 = scmp.lt.s32.totalorder %s26, 0
        %s235 = scalar_select %p234, %s26, 0
        %s236 = scalar_lea.vmem %s2, %s235
        %v237 = vld [vmem:[%s204] sm:$0xff]
        %v238 = vld [vmem:[#allocation5] sm:$0xff]
        %v239 = vld [vmem:[#allocation5 + $0x8] sm:$0xff]
        %v240 = vld [vmem:[#allocation5 + $0x10] sm:$0xff]
        %v241 = vld [vmem:[#allocation5 + $0x18] sm:$0xff]
        %v242 = vld [vmem:[#allocation5 + $0x20] sm:$0xff]
        %v243 = vld [vmem:[#allocation5 + $0x28] sm:$0xff]
        %v244 = vld [vmem:[#allocation5 + $0x30] sm:$0xff]
        %v245 = vld [vmem:[#allocation5 + $0x38] sm:$0xff]
        %v246 = vld [vmem:[#allocation5 + $0x40] sm:$0xff]
        %v247 = vld [vmem:[#allocation5 + $0x48] sm:$0xff]
        %v248 = vld [vmem:[#allocation5 + $0x50] sm:$0xff]
        %v249 = vld [vmem:[#allocation5 + $0x58] sm:$0xff]
        %v250 = vld [vmem:[#allocation5 + $0x60] sm:$0xff]
        %v251 = vld [vmem:[#allocation5 + $0x68] sm:$0xff]
        %v252 = vld [vmem:[#allocation5 + $0x70] sm:$0xff]
        %v253 = vld [vmem:[#allocation5 + $0x78] sm:$0xff]
        %v254 = vld [vmem:[%s236] sm:$0x1]
        %v256 = vlaneseq
        %v257 = vshrl.u32 %v256, 7
        %v258 = vsub.s32 0, %v257
        %v259 = vrot.slane %v254, %v258
        %261 = vmatprep.subr.mxu0 0.0
        %262 = vmatpush1.msra.mxu0 %v238
        %263 = vmatprep.subr.mxu0 0.0
        %264 = vmatpush1.msra.mxu0 %v239
        %265 = vmatprep.subr.mxu0 0.0
        %266 = vmatpush1.msra.mxu0 %v240
        %267 = vmatprep.subr.mxu0 0.0
        %268 = vmatpush1.msra.mxu0 %v241
        %269 = vmatprep.subr.mxu0 0.0
        %270 = vmatpush1.msra.mxu0 %v242
        %271 = vmatprep.subr.mxu0 0.0
        %272 = vmatpush1.msra.mxu0 %v243
        %273 = vmatprep.subr.mxu0 0.0
        %274 = vmatpush1.msra.mxu0 %v244
        %275 = vmatprep.subr.mxu0 0.0
        %276 = vmatpush1.msra.mxu0 %v245
        %277 = vmatprep.subr.mxu0 0.0
        %278 = vmatpush1.msra.mxu0 %v246
        %279 = vmatprep.subr.mxu0 0.0
        %280 = vmatpush1.msra.mxu0 %v247
        %281 = vmatprep.subr.mxu0 0.0
        %282 = vmatpush1.msra.mxu0 %v248
        %283 = vmatprep.subr.mxu0 0.0
        %284 = vmatpush1.msra.mxu0 %v249
        %285 = vmatprep.subr.mxu0 0.0
        %286 = vmatpush1.msra.mxu0 %v250
        %287 = vmatprep.subr.mxu0 0.0
        %288 = vmatpush1.msra.mxu0 %v251
        %289 = vmatprep.subr.mxu0 0.0
        %290 = vmatpush1.msra.mxu0 %v252
        %291 = vmatprep.subr.mxu0 0.0
        %292 = vmatpush1.msra.mxu0 %v253
        %293 = vmatprep.subr.mxu0 0.0
        %294 = vmatpush1.msra.mxu0 0.0
        %295 = vmatprep.subr.mxu0 0.0
        %296 = vmatpush1.msra.mxu0 0.0
        %297 = vmatprep.subr.mxu0 0.0
        %298 = vmatpush1.msra.mxu0 0.0
        %299 = vmatprep.subr.mxu0 0.0
        %300 = vmatpush1.msra.mxu0 0.0
        %301 = vmatprep.subr.mxu0 0.0
        %302 = vmatpush1.msra.mxu0 0.0
        %303 = vmatprep.subr.mxu0 0.0
        %304 = vmatpush1.msra.mxu0 0.0
        %305 = vmatprep.subr.mxu0 0.0
        %306 = vmatpush1.msra.mxu0 0.0
        %307 = vmatprep.subr.mxu0 0.0
        %308 = vmatpush1.msra.mxu0 0.0
        %309 = vmatprep.subr.mxu0 0.0
        %310 = vmatpush1.msra.mxu0 0.0
        %311 = vmatprep.subr.mxu0 0.0
        %312 = vmatpush1.msra.mxu0 0.0
        %313 = vmatprep.subr.mxu0 0.0
        %314 = vmatpush1.msra.mxu0 0.0
        %315 = vmatprep.subr.mxu0 0.0
        %316 = vmatpush1.msra.mxu0 0.0
        %317 = vmatprep.subr.mxu0 0.0
        %318 = vmatpush1.msra.mxu0 0.0
        %319 = vmatprep.subr.mxu0 0.0
        %320 = vmatpush1.msra.mxu0 0.0
        %321 = vmatprep.subr.mxu0 0.0
        %322 = vmatpush1.msra.mxu0 0.0
        %323 = vmatprep.subr.mxu0 0.0
        %324 = vmatpush1.msra.mxu0 0.0
        %325 = vmatprep.mubr.f32.mxu0 0.0
        %326 = vmatmul.mubr.f32.gmra.mrb[0].mxu0 %v237
        %v327 = vpop.f32.mrb[0].mxu0
        %v328 = vadd.f32 %v259, %v327
        %v329 = vpop.f32.mrb[0].mxu0
        %330 = vdwg.mxu0
        %v331 = vtanh.pop %v328
        %332 = vst [vmem:[%s233] sm:$0xff] %v331
        %s333 = sand.u32 %s121, 1
        %s334 = scalar_lea.sflag [#allocation4], %s333
        %s335 = sand.u32 %s121, 1
        %s336 = smul.addr %s335, 8
        %s337 = scalar_lea.vmem [#allocation7], %s336
        // Predicated region
        $region41: #{tpu_custom_call.1} parent=31 // pred_check
          %p338 = pneg %p131
        $region42: #{tpu_custom_call.1} parent=31 // pred_check_branch
          %340 = sbr.rel (%p338) target = $region44
        $region43: #{tpu_custom_call.1} parent=31 // pred_region
          %s342 = ssub.s32 128, 128
          %343 = vsyncadd %s334, %s342
          %s344 = sadd.s32 %s26, %s25
          %s345 = smul.addr %s344, 128
          %s346 = scalar_lea.hbm %s3, %s345
          %s348 = sshll.u32 %s337, 4
          %s349 = int_to_ptr.vmem [resolvable:$true] %s348
          %351 = dma.vmem_to_hbm [thread:$0]  %s349, 128, %s346, %s334
        $region44: #{tpu_custom_call.1} parent=31 // pred_fallthru
          _
      $region32: #{tpu_custom_call.1} parent=5 // pred_fallthru
        _
      %p352 = scmp.le.s32.totalorder 2, %s16
      // Predicated region
      $region45: #{tpu_custom_call.1} parent=5 // pred_check
        %p353 = pneg %p352
      $region46: #{tpu_custom_call.1} parent=5 // pred_check_branch
        %355 = sbr.rel (%p353) target = $region48
      $region47: #{tpu_custom_call.1} parent=5 // pred_region
        %s356 = ssub.s32 %s16, 2
        // Predicated region
        $region49: #{tpu_custom_call.1} parent=47 // pred_check
          %p357 = pneg %p137
        $region50: #{tpu_custom_call.1} parent=47 // pred_check_branch
          %359 = sbr.rel (%p357) target = $region52
        $region51: #{tpu_custom_call.1} parent=47 // pred_region
          %s360 = sand.u32 %s122, 1
          %s361 = scalar_lea.sflag [#allocation4], %s360
          %s362 = sand.u32 %s122, 1
          %s363 = smul.addr %s362, 8
          %s364 = scalar_lea.vmem [#allocation7], %s363
          %365 = dma.done %s361, 128
        $region52: #{tpu_custom_call.1} parent=47 // pred_fallthru
          _
      $region48: #{tpu_custom_call.1} parent=5 // pred_fallthru
        _
    $region6: #{tpu_custom_call.1} parent=1 // loop_footer
      %s20 = sadd.s32 1, %s16
    $region7: #{tpu_custom_call.1} parent=1 // loop_footer_branch
      %15 = sbr.rel target = $region3
    $region8: #{tpu_custom_call.1} parent=1 // loop_exit
      _
    %366 = vsyncpa [#allocation3], 1
    %s367 = scalar_lea.sflag [#allocation3], 1
    %368 = vsyncpa %s367, 1
    %369 = vsyncpa [#allocation6], 1
    %370 = vsyncpa [#allocation4], 1
    %s371 = scalar_lea.sflag [#allocation4], 1
    %372 = vsyncpa %s371, 1

</llo_original>
